<compile_context>
chip_gen: v6e
topology: v6e:2x2x1
jax: 0.10.0
libtpu: 0.0.40
codegen_flags: <defaults>
</compile_context>

<pallas_src>
import functools

import jax
import jax.numpy as jnp
from jax.experimental import pallas as pl
from jax.experimental.pallas import tpu as pltpu

_LANES = 128
_MAX_TILE_ROWS = 2048          # 2048x128 f32 = 1 MiB per operand tile
_HALF_LOG_2PI = 0.9189385332046727  # 0.5 * log(2*pi)

# Numerical-Recipes g=5 Lanczos coefficients, truncated to 5 terms.  The two
# dropped coefficients (1.208650973866179e-3, -5.395239384953e-6) contribute
# < ~4e-5 relative to the series for all z > 0, far below f32 resolution of
# the surrounding terms.  Valid for z > 0 (the form evaluates Gamma(z+1)/z, so
# the partial-fraction poles sit at z+1 .. z+4).
_NR_LANCZOS = (
    1.0,                    # exact value 1.000000000190015; 1.9e-10 is sub-f32
    76.18009172947146,
    -86.50532032941677,
    24.01409824083091,
    -1.231739572450155,
)
_LANCZOS_G_PLUS_HALF = 5.5


def _build_lanczos_polys():
    """Expand  ser(z)/z  into a fixed-coefficient polynomial ratio.

    ser(z) = c0 + sum_{j=1..4} c_j / (z + j)
    ser(z)/z = NUM(z) / DEN(z)  with
      NUM(z) = c0*prod(z+j) + sum_j c_j * prod_{i!=j}(z+i)   (monic, degree 4,
                                                              all-positive coeffs)
      DEN(z) = z * prod_{j=1..4}(z+j)                        (monic, degree 5)
    Returns the non-leading coefficients (highest degree first) of NUM and of
    prod(z+j); both Horner chains can then start with `z + tail[0]`.
    """
    c = _NR_LANCZOS
    J = len(c) - 1

    def pmul(p, q):
        r = [0.0] * (len(p) + len(q) - 1)
        for i, a in enumerate(p):
            for j, b in enumerate(q):
                r[i + j] += a * b
        return r

    def padd(p, q):
        n = max(len(p), len(q))
        p = [0.0] * (n - len(p)) + list(p)
        q = [0.0] * (n - len(q)) + list(q)
        return [a + b for a, b in zip(p, q)]

    prod_all = [1.0]
    for j in range(1, J + 1):
        prod_all = pmul(prod_all, [1.0, float(j)])

    num = [c[0] * x for x in prod_all]
    for j in range(1, J + 1):
        part = [1.0]
        for i in range(1, J + 1):
            if i != j:
                part = pmul(part, [1.0, float(i)])
        num = padd(num, [c[j] * x for x in part])

    return tuple(num[1:]), tuple(prod_all[1:])


_LG_NUM_TAIL, _LG_DEN_TAIL = _build_lanczos_polys()


def _horner_monic(z, tail):
    acc = z + tail[0]
    for coef in tail[1:]:
        acc = acc * z + coef
    return acc


def _lgamma_nc(z):
    """lgamma(z) - 0.5*log(2*pi), for z > 0.

    Two monic Horner chains (pure VALU mul/add, all-positive coefficients so
    no cancellation), one EUP approximate reciprocal and two EUP logs.
    DEN(z) ~ z^5 stays inside f32 range up to z ~ 4e7.
    """
    num = _horner_monic(z, _LG_NUM_TAIL)          # degree-4 numerator
    den = _horner_monic(z, _LG_DEN_TAIL) * z      # z * (z+1)(z+2)(z+3)(z+4)
    ratio = num * pl.reciprocal(den, approx=True)  # == ser(z) / z
    t = z + _LANCZOS_G_PLUS_HALF
    return (z + 0.5) * jnp.log(t) - t + jnp.log(ratio)


def _somatic_spectrum_kernel(
    logf_ref,     # SMEM (K-1,) f32: log f_k
    log1mf_ref,   # SMEM (K-1,) f32: log(1 - f_k)
    logw_ref,     # SMEM (K-1,) f32: log-softmax weights[:K-1] - 0.5*log(2*pi)
    scal_ref,     # SMEM (3,)   f32: [alpha, beta,
                  #                   log_weight_K + lgamma(a+b)-lgamma(a)-lgamma(b)]
    depth_ref,    # VMEM (tile_rows, 128) f32
    alt_ref,      # VMEM (tile_rows, 128) f32
    out_ref,      # VMEM (tile_rows, 128) f32
    *,
    num_components: int,
):
    n = depth_ref[...]
    k = alt_ref[...]
    nk = n - k

    # log (n choose k) up to the folded 0.5*log(2*pi) constants; factored out
    # of the logsumexp below (added once at the end).
    comb = _lgamma_nc(n + 1.0) - _lgamma_nc(k + 1.0) - _lgamma_nc(nk + 1.0)

    alpha = scal_ref[0]
    beta = scal_ref[1]
    bb_total = scal_ref[2]

    terms = []
    # K-1 plain binomial components (weight + k*log f + (n-k)*log(1-f))
    for j in range(num_components - 1):
        terms.append(logw_ref[j] + k * logf_ref[j] + nk * log1mf_ref[j])

    # background beta-binomial component (weight + constants folded host-side)
    terms.append(
        bb_total
        + _lgamma_nc(k + alpha)
        + _lgamma_nc(nk + beta)
        - _lgamma_nc(n + alpha + beta)
    )

    # logsumexp over the K mixture components, then add the shared comb term.
    m = terms[0]
    for t in terms[1:]:
        m = jnp.maximum(m, t)
    s = jnp.exp(terms[0] - m)
    for t in terms[1:]:
        s = s + jnp.exp(t - m)
    out_ref[...] = comb + m + jnp.log(s)


def somatic_spectrum_forward(depths_b, alt_counts_b, params, *,
                             max_tile_rows=_MAX_TILE_ROWS):
    """Pallas implementation of SomaticSpectrum.forward.

    depths_b, alt_counts_b: float (B,) tensors.
    params: dict with 'weights_pre_softmax_k' (K,), 'f_pre_sigmoid_k' (K-1,),
            'alpha_pre_exp' (), 'beta_pre_exp' ().
    Returns float32 (B,) mixture log-likelihoods.
    """
    weights_pre_softmax_k = params["weights_pre_softmax_k"]
    num_components = weights_pre_softmax_k.shape[0]

    # ---- parameter glue (O(K), outside the kernel) ----
    f_k = jax.nn.sigmoid(params["f_pre_sigmoid_k"]).astype(jnp.float32)
    logf_k = jnp.log(f_k)
    log1mf_k = jnp.log1p(-f_k)
    logw_k = jax.nn.log_softmax(weights_pre_softmax_k).astype(jnp.float32)
    alpha = jnp.exp(params["alpha_pre_exp"]).astype(jnp.float32)
    beta = jnp.exp(params["beta_pre_exp"]).astype(jnp.float32)
    bb_base = (
        jax.lax.lgamma(alpha + beta) - jax.lax.lgamma(alpha) - jax.lax.lgamma(beta)
    )
    # Fold all 0.5*log(2*pi) bookkeeping into the per-component constants:
    #   result = comb_nc + logsumexp_j(term_j)   with
    #   term_j      = (logw_j - HALF_LOG_2PI) + k*logf_j + (n-k)*log1mf_j
    #   term_{K-1}  = (logw_{K-1} + bb_base)  + lgc(k+a)+lgc(n-k+b)-lgc(n+a+b)
    logw_adj = (logw_k[: num_components - 1] - _HALF_LOG_2PI).astype(jnp.float32)
    bb_total = logw_k[num_components - 1] + bb_base
    scal = jnp.stack([alpha, beta, bb_total]).astype(jnp.float32)

    # ---- batch layout (no full-array pad unless batch % 128 != 0) ----
    batch_size = depths_b.shape[0]
    rows = pl.cdiv(batch_size, _LANES)
    rem = batch_size % _LANES
    depths_f = depths_b.astype(jnp.float32)
    alts_f = alt_counts_b.astype(jnp.float32)
    if rem:
        # Only a non-multiple-of-128 batch pays a tail pad (harmless
        # depth=1 / alt=0 entries, sliced off afterwards).
        pad = _LANES - rem
        depths_f = jnp.pad(depths_f, (0, pad), constant_values=1.0)
        alts_f = jnp.pad(alts_f, (0, pad), constant_values=0.0)
    depths_2d = depths_f.reshape(rows, _LANES)
    alts_2d = alts_f.reshape(rows, _LANES)

    # ---- tile selection ----
    if rows <= 8:
        # Single block equal to the full array (no sublane-divisibility needed).
        tile_rows = rows
    else:
        # Split into >= 2 grid steps (keeps both v7x TensorCores busy via the
        # "parallel" axis), rounded to a sublane multiple of 8, capped so one
        # tile stays ~1 MiB.  Rows need not divide tile_rows: the trailing
        # ragged block is masked by Pallas.
        tile_rows = min(max_tile_rows, pl.cdiv(pl.cdiv(rows, 2), 8) * 8)
    grid_len = pl.cdiv(rows, tile_rows)

    kernel = functools.partial(_somatic_spectrum_kernel,
                               num_components=num_components)

    out_2d = pl.pallas_call(
        kernel,
        out_shape=jax.ShapeDtypeStruct((rows, _LANES), jnp.float32),
        grid=(grid_len,),
        in_specs=[
            pl.BlockSpec(memory_space=pltpu.MemorySpace.SMEM),  # logf_k
            pl.BlockSpec(memory_space=pltpu.MemorySpace.SMEM),  # log1mf_k
            pl.BlockSpec(memory_space=pltpu.MemorySpace.SMEM),  # logw_adj
            pl.BlockSpec(memory_space=pltpu.MemorySpace.SMEM),  # [alpha, beta, bb_total]
            pl.BlockSpec((tile_rows, _LANES), lambda i: (i, 0)),  # depths
            pl.BlockSpec((tile_rows, _LANES), lambda i: (i, 0)),  # alt counts
        ],
        out_specs=pl.BlockSpec((tile_rows, _LANES), lambda i: (i, 0)),
        # Row blocks are independent -> "parallel" (sharded across v7x cores).
        compiler_params=pltpu.CompilerParams(dimension_semantics=("parallel",)),
    )(logf_k, log1mf_k, logw_adj, scal, depths_2d, alts_2d)

    return out_2d.reshape(rows * _LANES)[:batch_size]


def somatic_spectrum_reference(depths_b, alt_counts_b, params):
    """Pure-JAX reference matching the PyTorch module semantics."""
    from jax.scipy.special import gammaln
    from jax.scipy.special import logsumexp

    n = depths_b.astype(jnp.float32)
    k = alt_counts_b.astype(jnp.float32)

    f_k = jax.nn.sigmoid(params["f_pre_sigmoid_k"])
    alpha = jnp.exp(params["alpha_pre_exp"])
    beta = jnp.exp(params["beta_pre_exp"])

    comb = gammaln(n + 1.0) - gammaln(n - k + 1.0) - gammaln(k + 1.0)
    binom_bk = (
        comb[:, None]
        + k[:, None] * jnp.log(f_k)[None, :]
        + (n - k)[:, None] * jnp.log1p(-f_k)[None, :]
    )
    beta_binom_b = (
        comb
        + gammaln(k + alpha)
        + gammaln(n - k + beta)
        + gammaln(alpha + beta)
        - gammaln(n + alpha + beta)
        - gammaln(alpha)
        - gammaln(beta)
    )
    ll_bk = jnp.concatenate([binom_bk, beta_binom_b[:, None]], axis=1)
    logw_k = jax.nn.log_softmax(params["weights_pre_softmax_k"])
    return logsumexp(logw_k[None, :] + ll_bk, axis=1)


def init_params(num_components: int):
    """Deterministic init matching SomaticSpectrum.__init__."""
    K = num_components
    return {
        "weights_pre_softmax_k": jnp.ones((K,), jnp.float32),
        "f_pre_sigmoid_k": (
            4.0 * jnp.arange(K - 1, dtype=jnp.float32) / (K - 1) - 2.0
        ),
        "alpha_pre_exp": jnp.asarray(1.0, jnp.float32),
        "beta_pre_exp": jnp.asarray(1.0, jnp.float32),
    }


# TODO(synk): SomaticSpectrum.fit / spectrum_density_vs_fraction / plot_spectrum
# (training loop and plotting utilities) are not kernel material; only forward
# is implemented here.


if __name__ == "__main__":
    num_components = 3
    params = init_params(num_components)
    key = jax.random.PRNGKey(0)

    def make_case(case_key, batch):
        k1, k2 = jax.random.split(case_key)
        depths = jax.random.randint(k1, (batch,), 10, 100).astype(jnp.float32)
        fracs = jax.random.uniform(k2, (batch,))
        alts = jnp.floor(fracs * depths).astype(jnp.float32)
        return depths, alts

    # 200   : batch % 128 != 0       -> tail-pad path, single small block
    # 1024  : 8 rows, zero-copy path -> single full-array block
    # 4736  : 37 rows, zero-copy     -> 2 grid steps, ragged trailing block
    cases = [200, 1024, 4736]
    for i, b in enumerate(cases):
        depths_b, alt_counts_b = make_case(jax.random.fold_in(key, i), b)
        result = somatic_spectrum_forward(depths_b, alt_counts_b, params)
        result = jax.block_until_ready(result)
        ref = somatic_spectrum_reference(depths_b, alt_counts_b, params)
        assert result.shape == (b,)
        assert bool(jnp.all(jnp.isfinite(result)))
        max_err = float(jnp.max(jnp.abs(result - ref)))
        assert jnp.allclose(result, ref, atol=1e-2, rtol=1e-3), (
            f"batch={b}: mismatch vs reference, max abs err {max_err}"
        )
    print("KERNEL_OK")
</pallas_src>

<mosaic_0001>
module attributes {stable_mosaic.version = 11 : i64} {
  func.func @_somatic_spectrum_kernel(%arg0: i32, %arg1: memref<2xf32, #tpu.memory_space<smem>>, %arg2: memref<2xf32, #tpu.memory_space<smem>>, %arg3: memref<2xf32, #tpu.memory_space<smem>>, %arg4: memref<3xf32, #tpu.memory_space<smem>>, %arg5: memref<2x128xf32, #tpu.memory_space<vmem>>, %arg6: memref<2x128xf32, #tpu.memory_space<vmem>>, %arg7: memref<2x128xf32, #tpu.memory_space<vmem>>) attributes {dimension_semantics = [#tpu.dimension_semantics<parallel>], iteration_bounds = array<i64: 1>, scalar_prefetch = 0 : i64, scratch_operands = 0 : i64, tpu.core_type = #tpu.core_type<tc>, window_params = [{transform_indices = @transform_0, window_bounds = array<i64: 2>}, {transform_indices = @transform_1, window_bounds = array<i64: 2>}, {transform_indices = @transform_2, window_bounds = array<i64: 2>}, {transform_indices = @transform_3, window_bounds = array<i64: 3>}, {transform_indices = @transform_4, window_bounds = array<i64: 2, 128>}, {transform_indices = @transform_5, window_bounds = array<i64: 2, 128>}, {transform_indices = @transform_6, window_bounds = array<i64: 2, 128>}]} {
    %c0 = arith.constant 0 : index
    %c0_0 = arith.constant 0 : index
    %0 = vector.load %arg5[%c0, %c0_0] : memref<2x128xf32, #tpu.memory_space<vmem>>, vector<2x128xf32>
    %c0_1 = arith.constant 0 : index
    %c0_2 = arith.constant 0 : index
    %1 = vector.load %arg6[%c0_1, %c0_2] : memref<2x128xf32, #tpu.memory_space<vmem>>, vector<2x128xf32>
    %2 = arith.subf %0, %1 : vector<2x128xf32>
    %cst = arith.constant 1.000000e+00 : f32
    %3 = vector.broadcast %cst : f32 to vector<2x128xf32>
    %4 = arith.addf %0, %3 : vector<2x128xf32>
    %cst_3 = arith.constant 22.4571304 : f32
    %5 = vector.broadcast %cst_3 : f32 to vector<2x128xf32>
    %6 = arith.addf %4, %5 : vector<2x128xf32>
    %7 = arith.mulf %6, %4 : vector<2x128xf32>
    %cst_4 = arith.constant 189.286514 : f32
    %8 = vector.broadcast %cst_4 : f32 to vector<2x128xf32>
    %9 = arith.addf %7, %8 : vector<2x128xf32>
    %10 = arith.mulf %9, %4 : vector<2x128xf32>
    %cst_5 = arith.constant 709.729553 : f32
    %11 = vector.broadcast %cst_5 : f32 to vector<2x128xf32>
    %12 = arith.addf %10, %11 : vector<2x128xf32>
    %13 = arith.mulf %12, %4 : vector<2x128xf32>
    %cst_6 = arith.constant 998.980712 : f32
    %14 = vector.broadcast %cst_6 : f32 to vector<2x128xf32>
    %15 = arith.addf %13, %14 : vector<2x128xf32>
    %cst_7 = arith.constant 1.000000e+01 : f32
    %16 = vector.broadcast %cst_7 : f32 to vector<2x128xf32>
    %17 = arith.addf %4, %16 : vector<2x128xf32>
    %18 = arith.mulf %17, %4 : vector<2x128xf32>
    %cst_8 = arith.constant 3.500000e+01 : f32
    %19 = vector.broadcast %cst_8 : f32 to vector<2x128xf32>
    %20 = arith.addf %18, %19 : vector<2x128xf32>
    %21 = arith.mulf %20, %4 : vector<2x128xf32>
    %cst_9 = arith.constant 5.000000e+01 : f32
    %22 = vector.broadcast %cst_9 : f32 to vector<2x128xf32>
    %23 = arith.addf %21, %22 : vector<2x128xf32>
    %24 = arith.mulf %23, %4 : vector<2x128xf32>
    %cst_10 = arith.constant 2.400000e+01 : f32
    %25 = vector.broadcast %cst_10 : f32 to vector<2x128xf32>
    %26 = arith.addf %24, %25 : vector<2x128xf32>
    %27 = arith.mulf %26, %4 : vector<2x128xf32>
    %28 = tpu.reciprocal %27 {approx = true} : vector<2x128xf32> -> vector<2x128xf32>
    %29 = arith.mulf %15, %28 : vector<2x128xf32>
    %cst_11 = arith.constant 5.500000e+00 : f32
    %30 = vector.broadcast %cst_11 : f32 to vector<2x128xf32>
    %31 = arith.addf %4, %30 : vector<2x128xf32>
    %cst_12 = arith.constant 5.000000e-01 : f32
    %32 = vector.broadcast %cst_12 : f32 to vector<2x128xf32>
    %33 = arith.addf %4, %32 : vector<2x128xf32>
    %34 = math.log %31 : vector<2x128xf32>
    %35 = arith.mulf %33, %34 : vector<2x128xf32>
    %36 = arith.subf %35, %31 : vector<2x128xf32>
    %37 = math.log %29 : vector<2x128xf32>
    %38 = arith.addf %36, %37 : vector<2x128xf32>
    %cst_13 = arith.constant 1.000000e+00 : f32
    %39 = vector.broadcast %cst_13 : f32 to vector<2x128xf32>
    %40 = arith.addf %1, %39 : vector<2x128xf32>
    %cst_14 = arith.constant 22.4571304 : f32
    %41 = vector.broadcast %cst_14 : f32 to vector<2x128xf32>
    %42 = arith.addf %40, %41 : vector<2x128xf32>
    %43 = arith.mulf %42, %40 : vector<2x128xf32>
    %cst_15 = arith.constant 189.286514 : f32
    %44 = vector.broadcast %cst_15 : f32 to vector<2x128xf32>
    %45 = arith.addf %43, %44 : vector<2x128xf32>
    %46 = arith.mulf %45, %40 : vector<2x128xf32>
    %cst_16 = arith.constant 709.729553 : f32
    %47 = vector.broadcast %cst_16 : f32 to vector<2x128xf32>
    %48 = arith.addf %46, %47 : vector<2x128xf32>
    %49 = arith.mulf %48, %40 : vector<2x128xf32>
    %cst_17 = arith.constant 998.980712 : f32
    %50 = vector.broadcast %cst_17 : f32 to vector<2x128xf32>
    %51 = arith.addf %49, %50 : vector<2x128xf32>
    %cst_18 = arith.constant 1.000000e+01 : f32
    %52 = vector.broadcast %cst_18 : f32 to vector<2x128xf32>
    %53 = arith.addf %40, %52 : vector<2x128xf32>
    %54 = arith.mulf %53, %40 : vector<2x128xf32>
    %cst_19 = arith.constant 3.500000e+01 : f32
    %55 = vector.broadcast %cst_19 : f32 to vector<2x128xf32>
    %56 = arith.addf %54, %55 : vector<2x128xf32>
    %57 = arith.mulf %56, %40 : vector<2x128xf32>
    %cst_20 = arith.constant 5.000000e+01 : f32
    %58 = vector.broadcast %cst_20 : f32 to vector<2x128xf32>
    %59 = arith.addf %57, %58 : vector<2x128xf32>
    %60 = arith.mulf %59, %40 : vector<2x128xf32>
    %cst_21 = arith.constant 2.400000e+01 : f32
    %61 = vector.broadcast %cst_21 : f32 to vector<2x128xf32>
    %62 = arith.addf %60, %61 : vector<2x128xf32>
    %63 = arith.mulf %62, %40 : vector<2x128xf32>
    %64 = tpu.reciprocal %63 {approx = true} : vector<2x128xf32> -> vector<2x128xf32>
    %65 = arith.mulf %51, %64 : vector<2x128xf32>
    %cst_22 = arith.constant 5.500000e+00 : f32
    %66 = vector.broadcast %cst_22 : f32 to vector<2x128xf32>
    %67 = arith.addf %40, %66 : vector<2x128xf32>
    %cst_23 = arith.constant 5.000000e-01 : f32
    %68 = vector.broadcast %cst_23 : f32 to vector<2x128xf32>
    %69 = arith.addf %40, %68 : vector<2x128xf32>
    %70 = math.log %67 : vector<2x128xf32>
    %71 = arith.mulf %69, %70 : vector<2x128xf32>
    %72 = arith.subf %71, %67 : vector<2x128xf32>
    %73 = math.log %65 : vector<2x128xf32>
    %74 = arith.addf %72, %73 : vector<2x128xf32>
    %75 = arith.subf %38, %74 : vector<2x128xf32>
    %cst_24 = arith.constant 1.000000e+00 : f32
    %76 = vector.broadcast %cst_24 : f32 to vector<2x128xf32>
    %77 = arith.addf %2, %76 : vector<2x128xf32>
    %cst_25 = arith.constant 22.4571304 : f32
    %78 = vector.broadcast %cst_25 : f32 to vector<2x128xf32>
    %79 = arith.addf %77, %78 : vector<2x128xf32>
    %80 = arith.mulf %79, %77 : vector<2x128xf32>
    %cst_26 = arith.constant 189.286514 : f32
    %81 = vector.broadcast %cst_26 : f32 to vector<2x128xf32>
    %82 = arith.addf %80, %81 : vector<2x128xf32>
    %83 = arith.mulf %82, %77 : vector<2x128xf32>
    %cst_27 = arith.constant 709.729553 : f32
    %84 = vector.broadcast %cst_27 : f32 to vector<2x128xf32>
    %85 = arith.addf %83, %84 : vector<2x128xf32>
    %86 = arith.mulf %85, %77 : vector<2x128xf32>
    %cst_28 = arith.constant 998.980712 : f32
    %87 = vector.broadcast %cst_28 : f32 to vector<2x128xf32>
    %88 = arith.addf %86, %87 : vector<2x128xf32>
    %cst_29 = arith.constant 1.000000e+01 : f32
    %89 = vector.broadcast %cst_29 : f32 to vector<2x128xf32>
    %90 = arith.addf %77, %89 : vector<2x128xf32>
    %91 = arith.mulf %90, %77 : vector<2x128xf32>
    %cst_30 = arith.constant 3.500000e+01 : f32
    %92 = vector.broadcast %cst_30 : f32 to vector<2x128xf32>
    %93 = arith.addf %91, %92 : vector<2x128xf32>
    %94 = arith.mulf %93, %77 : vector<2x128xf32>
    %cst_31 = arith.constant 5.000000e+01 : f32
    %95 = vector.broadcast %cst_31 : f32 to vector<2x128xf32>
    %96 = arith.addf %94, %95 : vector<2x128xf32>
    %97 = arith.mulf %96, %77 : vector<2x128xf32>
    %cst_32 = arith.constant 2.400000e+01 : f32
    %98 = vector.broadcast %cst_32 : f32 to vector<2x128xf32>
    %99 = arith.addf %97, %98 : vector<2x128xf32>
    %100 = arith.mulf %99, %77 : vector<2x128xf32>
    %101 = tpu.reciprocal %100 {approx = true} : vector<2x128xf32> -> vector<2x128xf32>
    %102 = arith.mulf %88, %101 : vector<2x128xf32>
    %cst_33 = arith.constant 5.500000e+00 : f32
    %103 = vector.broadcast %cst_33 : f32 to vector<2x128xf32>
    %104 = arith.addf %77, %103 : vector<2x128xf32>
    %cst_34 = arith.constant 5.000000e-01 : f32
    %105 = vector.broadcast %cst_34 : f32 to vector<2x128xf32>
    %106 = arith.addf %77, %105 : vector<2x128xf32>
    %107 = math.log %104 : vector<2x128xf32>
    %108 = arith.mulf %106, %107 : vector<2x128xf32>
    %109 = arith.subf %108, %104 : vector<2x128xf32>
    %110 = math.log %102 : vector<2x128xf32>
    %111 = arith.addf %109, %110 : vector<2x128xf32>
    %112 = arith.subf %75, %111 : vector<2x128xf32>
    %c0_35 = arith.constant 0 : index
    %113 = memref.load %arg4[%c0_35] : memref<3xf32, #tpu.memory_space<smem>>
    %c1 = arith.constant 1 : index
    %114 = memref.load %arg4[%c1] : memref<3xf32, #tpu.memory_space<smem>>
    %c2 = arith.constant 2 : index
    %115 = memref.load %arg4[%c2] : memref<3xf32, #tpu.memory_space<smem>>
    %c0_36 = arith.constant 0 : index
    %116 = memref.load %arg3[%c0_36] : memref<2xf32, #tpu.memory_space<smem>>
    %c0_37 = arith.constant 0 : index
    %117 = memref.load %arg1[%c0_37] : memref<2xf32, #tpu.memory_space<smem>>
    %118 = vector.broadcast %117 : f32 to vector<2x128xf32>
    %119 = arith.mulf %1, %118 : vector<2x128xf32>
    %120 = vector.broadcast %116 : f32 to vector<2x128xf32>
    %121 = arith.addf %120, %119 : vector<2x128xf32>
    %c0_38 = arith.constant 0 : index
    %122 = memref.load %arg2[%c0_38] : memref<2xf32, #tpu.memory_space<smem>>
    %123 = vector.broadcast %122 : f32 to vector<2x128xf32>
    %124 = arith.mulf %2, %123 : vector<2x128xf32>
    %125 = arith.addf %121, %124 : vector<2x128xf32>
    %c1_39 = arith.constant 1 : index
    %126 = memref.load %arg3[%c1_39] : memref<2xf32, #tpu.memory_space<smem>>
    %c1_40 = arith.constant 1 : index
    %127 = memref.load %arg1[%c1_40] : memref<2xf32, #tpu.memory_space<smem>>
    %128 = vector.broadcast %127 : f32 to vector<2x128xf32>
    %129 = arith.mulf %1, %128 : vector<2x128xf32>
    %130 = vector.broadcast %126 : f32 to vector<2x128xf32>
    %131 = arith.addf %130, %129 : vector<2x128xf32>
    %c1_41 = arith.constant 1 : index
    %132 = memref.load %arg2[%c1_41] : memref<2xf32, #tpu.memory_space<smem>>
    %133 = vector.broadcast %132 : f32 to vector<2x128xf32>
    %134 = arith.mulf %2, %133 : vector<2x128xf32>
    %135 = arith.addf %131, %134 : vector<2x128xf32>
    %136 = vector.broadcast %113 : f32 to vector<2x128xf32>
    %137 = arith.addf %1, %136 : vector<2x128xf32>
    %cst_42 = arith.constant 22.4571304 : f32
    %138 = vector.broadcast %cst_42 : f32 to vector<2x128xf32>
    %139 = arith.addf %137, %138 : vector<2x128xf32>
    %140 = arith.mulf %139, %137 : vector<2x128xf32>
    %cst_43 = arith.constant 189.286514 : f32
    %141 = vector.broadcast %cst_43 : f32 to vector<2x128xf32>
    %142 = arith.addf %140, %141 : vector<2x128xf32>
    %143 = arith.mulf %142, %137 : vector<2x128xf32>
    %cst_44 = arith.constant 709.729553 : f32
    %144 = vector.broadcast %cst_44 : f32 to vector<2x128xf32>
    %145 = arith.addf %143, %144 : vector<2x128xf32>
    %146 = arith.mulf %145, %137 : vector<2x128xf32>
    %cst_45 = arith.constant 998.980712 : f32
    %147 = vector.broadcast %cst_45 : f32 to vector<2x128xf32>
    %148 = arith.addf %146, %147 : vector<2x128xf32>
    %cst_46 = arith.constant 1.000000e+01 : f32
    %149 = vector.broadcast %cst_46 : f32 to vector<2x128xf32>
    %150 = arith.addf %137, %149 : vector<2x128xf32>
    %151 = arith.mulf %150, %137 : vector<2x128xf32>
    %cst_47 = arith.constant 3.500000e+01 : f32
    %152 = vector.broadcast %cst_47 : f32 to vector<2x128xf32>
    %153 = arith.addf %151, %152 : vector<2x128xf32>
    %154 = arith.mulf %153, %137 : vector<2x128xf32>
    %cst_48 = arith.constant 5.000000e+01 : f32
    %155 = vector.broadcast %cst_48 : f32 to vector<2x128xf32>
    %156 = arith.addf %154, %155 : vector<2x128xf32>
    %157 = arith.mulf %156, %137 : vector<2x128xf32>
    %cst_49 = arith.constant 2.400000e+01 : f32
    %158 = vector.broadcast %cst_49 : f32 to vector<2x128xf32>
    %159 = arith.addf %157, %158 : vector<2x128xf32>
    %160 = arith.mulf %159, %137 : vector<2x128xf32>
    %161 = tpu.reciprocal %160 {approx = true} : vector<2x128xf32> -> vector<2x128xf32>
    %162 = arith.mulf %148, %161 : vector<2x128xf32>
    %cst_50 = arith.constant 5.500000e+00 : f32
    %163 = vector.broadcast %cst_50 : f32 to vector<2x128xf32>
    %164 = arith.addf %137, %163 : vector<2x128xf32>
    %cst_51 = arith.constant 5.000000e-01 : f32
    %165 = vector.broadcast %cst_51 : f32 to vector<2x128xf32>
    %166 = arith.addf %137, %165 : vector<2x128xf32>
    %167 = math.log %164 : vector<2x128xf32>
    %168 = arith.mulf %166, %167 : vector<2x128xf32>
    %169 = arith.subf %168, %164 : vector<2x128xf32>
    %170 = math.log %162 : vector<2x128xf32>
    %171 = arith.addf %169, %170 : vector<2x128xf32>
    %172 = vector.broadcast %115 : f32 to vector<2x128xf32>
    %173 = arith.addf %172, %171 : vector<2x128xf32>
    %174 = vector.broadcast %114 : f32 to vector<2x128xf32>
    %175 = arith.addf %2, %174 : vector<2x128xf32>
    %cst_52 = arith.constant 22.4571304 : f32
    %176 = vector.broadcast %cst_52 : f32 to vector<2x128xf32>
    %177 = arith.addf %175, %176 : vector<2x128xf32>
    %178 = arith.mulf %177, %175 : vector<2x128xf32>
    %cst_53 = arith.constant 189.286514 : f32
    %179 = vector.broadcast %cst_53 : f32 to vector<2x128xf32>
    %180 = arith.addf %178, %179 : vector<2x128xf32>
    %181 = arith.mulf %180, %175 : vector<2x128xf32>
    %cst_54 = arith.constant 709.729553 : f32
    %182 = vector.broadcast %cst_54 : f32 to vector<2x128xf32>
    %183 = arith.addf %181, %182 : vector<2x128xf32>
    %184 = arith.mulf %183, %175 : vector<2x128xf32>
    %cst_55 = arith.constant 998.980712 : f32
    %185 = vector.broadcast %cst_55 : f32 to vector<2x128xf32>
    %186 = arith.addf %184, %185 : vector<2x128xf32>
    %cst_56 = arith.constant 1.000000e+01 : f32
    %187 = vector.broadcast %cst_56 : f32 to vector<2x128xf32>
    %188 = arith.addf %175, %187 : vector<2x128xf32>
    %189 = arith.mulf %188, %175 : vector<2x128xf32>
    %cst_57 = arith.constant 3.500000e+01 : f32
    %190 = vector.broadcast %cst_57 : f32 to vector<2x128xf32>
    %191 = arith.addf %189, %190 : vector<2x128xf32>
    %192 = arith.mulf %191, %175 : vector<2x128xf32>
    %cst_58 = arith.constant 5.000000e+01 : f32
    %193 = vector.broadcast %cst_58 : f32 to vector<2x128xf32>
    %194 = arith.addf %192, %193 : vector<2x128xf32>
    %195 = arith.mulf %194, %175 : vector<2x128xf32>
    %cst_59 = arith.constant 2.400000e+01 : f32
    %196 = vector.broadcast %cst_59 : f32 to vector<2x128xf32>
    %197 = arith.addf %195, %196 : vector<2x128xf32>
    %198 = arith.mulf %197, %175 : vector<2x128xf32>
    %199 = tpu.reciprocal %198 {approx = true} : vector<2x128xf32> -> vector<2x128xf32>
    %200 = arith.mulf %186, %199 : vector<2x128xf32>
    %cst_60 = arith.constant 5.500000e+00 : f32
    %201 = vector.broadcast %cst_60 : f32 to vector<2x128xf32>
    %202 = arith.addf %175, %201 : vector<2x128xf32>
    %cst_61 = arith.constant 5.000000e-01 : f32
    %203 = vector.broadcast %cst_61 : f32 to vector<2x128xf32>
    %204 = arith.addf %175, %203 : vector<2x128xf32>
    %205 = math.log %202 : vector<2x128xf32>
    %206 = arith.mulf %204, %205 : vector<2x128xf32>
    %207 = arith.subf %206, %202 : vector<2x128xf32>
    %208 = math.log %200 : vector<2x128xf32>
    %209 = arith.addf %207, %208 : vector<2x128xf32>
    %210 = arith.addf %173, %209 : vector<2x128xf32>
    %211 = vector.broadcast %113 : f32 to vector<2x128xf32>
    %212 = arith.addf %0, %211 : vector<2x128xf32>
    %213 = vector.broadcast %114 : f32 to vector<2x128xf32>
    %214 = arith.addf %212, %213 : vector<2x128xf32>
    %cst_62 = arith.constant 22.4571304 : f32
    %215 = vector.broadcast %cst_62 : f32 to vector<2x128xf32>
    %216 = arith.addf %214, %215 : vector<2x128xf32>
    %217 = arith.mulf %216, %214 : vector<2x128xf32>
    %cst_63 = arith.constant 189.286514 : f32
    %218 = vector.broadcast %cst_63 : f32 to vector<2x128xf32>
    %219 = arith.addf %217, %218 : vector<2x128xf32>
    %220 = arith.mulf %219, %214 : vector<2x128xf32>
    %cst_64 = arith.constant 709.729553 : f32
    %221 = vector.broadcast %cst_64 : f32 to vector<2x128xf32>
    %222 = arith.addf %220, %221 : vector<2x128xf32>
    %223 = arith.mulf %222, %214 : vector<2x128xf32>
    %cst_65 = arith.constant 998.980712 : f32
    %224 = vector.broadcast %cst_65 : f32 to vector<2x128xf32>
    %225 = arith.addf %223, %224 : vector<2x128xf32>
    %cst_66 = arith.constant 1.000000e+01 : f32
    %226 = vector.broadcast %cst_66 : f32 to vector<2x128xf32>
    %227 = arith.addf %214, %226 : vector<2x128xf32>
    %228 = arith.mulf %227, %214 : vector<2x128xf32>
    %cst_67 = arith.constant 3.500000e+01 : f32
    %229 = vector.broadcast %cst_67 : f32 to vector<2x128xf32>
    %230 = arith.addf %228, %229 : vector<2x128xf32>
    %231 = arith.mulf %230, %214 : vector<2x128xf32>
    %cst_68 = arith.constant 5.000000e+01 : f32
    %232 = vector.broadcast %cst_68 : f32 to vector<2x128xf32>
    %233 = arith.addf %231, %232 : vector<2x128xf32>
    %234 = arith.mulf %233, %214 : vector<2x128xf32>
    %cst_69 = arith.constant 2.400000e+01 : f32
    %235 = vector.broadcast %cst_69 : f32 to vector<2x128xf32>
    %236 = arith.addf %234, %235 : vector<2x128xf32>
    %237 = arith.mulf %236, %214 : vector<2x128xf32>
    %238 = tpu.reciprocal %237 {approx = true} : vector<2x128xf32> -> vector<2x128xf32>
    %239 = arith.mulf %225, %238 : vector<2x128xf32>
    %cst_70 = arith.constant 5.500000e+00 : f32
    %240 = vector.broadcast %cst_70 : f32 to vector<2x128xf32>
    %241 = arith.addf %214, %240 : vector<2x128xf32>
    %cst_71 = arith.constant 5.000000e-01 : f32
    %242 = vector.broadcast %cst_71 : f32 to vector<2x128xf32>
    %243 = arith.addf %214, %242 : vector<2x128xf32>
    %244 = math.log %241 : vector<2x128xf32>
    %245 = arith.mulf %243, %244 : vector<2x128xf32>
    %246 = arith.subf %245, %241 : vector<2x128xf32>
    %247 = math.log %239 : vector<2x128xf32>
    %248 = arith.addf %246, %247 : vector<2x128xf32>
    %249 = arith.subf %210, %248 : vector<2x128xf32>
    %250 = arith.maximumf %125, %135 : vector<2x128xf32>
    %251 = arith.maximumf %250, %249 : vector<2x128xf32>
    %252 = arith.subf %125, %251 : vector<2x128xf32>
    %253 = math.exp %252 : vector<2x128xf32>
    %254 = arith.subf %135, %251 : vector<2x128xf32>
    %255 = math.exp %254 : vector<2x128xf32>
    %256 = arith.addf %253, %255 : vector<2x128xf32>
    %257 = arith.subf %249, %251 : vector<2x128xf32>
    %258 = math.exp %257 : vector<2x128xf32>
    %259 = arith.addf %256, %258 : vector<2x128xf32>
    %260 = arith.addf %112, %251 : vector<2x128xf32>
    %261 = math.log %259 : vector<2x128xf32>
    %262 = arith.addf %260, %261 : vector<2x128xf32>
    %c0_72 = arith.constant 0 : index
    %c0_73 = arith.constant 0 : index
    %263 = vector.load %arg7[%c0_72, %c0_73] : memref<2x128xf32, #tpu.memory_space<vmem>>, vector<2x128xf32>
    tpu.vector_store %arg7[%c0_72, %c0_73], %262 {strides = array<i32>} : memref<2x128xf32, #tpu.memory_space<vmem>>, vector<2x128xf32>,
    return
  }
  func.func @transform_0(%arg0: i32) -> i32 {
    %c0_i32 = arith.constant 0 : i32
    %c0_i32_0 = arith.constant 0 : i32
    return %c0_i32 : i32
  }
  func.func @transform_1(%arg0: i32) -> i32 {
    %c0_i32 = arith.constant 0 : i32
    %c0_i32_0 = arith.constant 0 : i32
    return %c0_i32 : i32
  }
  func.func @transform_2(%arg0: i32) -> i32 {
    %c0_i32 = arith.constant 0 : i32
    %c0_i32_0 = arith.constant 0 : i32
    return %c0_i32 : i32
  }
  func.func @transform_3(%arg0: i32) -> i32 {
    %c0_i32 = arith.constant 0 : i32
    %c0_i32_0 = arith.constant 0 : i32
    return %c0_i32 : i32
  }
  func.func @transform_4(%arg0: i32) -> (i32, i32) {
    %c0_i32 = arith.constant 0 : i32
    %c0_i32_0 = arith.constant 0 : i32
    return %arg0, %c0_i32 : i32, i32
  }
  func.func @transform_5(%arg0: i32) -> (i32, i32) {
    %c0_i32 = arith.constant 0 : i32
    %c0_i32_0 = arith.constant 0 : i32
    return %arg0, %c0_i32 : i32, i32
  }
  func.func @transform_6(%arg0: i32) -> (i32, i32) {
    %c0_i32 = arith.constant 0 : i32
    %c0_i32_0 = arith.constant 0 : i32
    return %arg0, %c0_i32 : i32, i32
  }
}

</mosaic_0001>

<llo_original>
// kernel: tpu_custom_call.1
$region0: #{tpu_custom_call.1}
  #allocation0 [shape = 'u32[]', space=smem, size = 0x4, offset = 0x4, fixed_abs, tag = 'smem constant byte address 0x4 - core index']
  #allocation1 [shape = 'u32[144,128]{1,0:T(1,128)}', space=vmem, size = 0x12000, scoped, tag = 'internal scratch']
  %s0 = inlined_call_operand.hbm [shape: f32[2], index: 0, kind: input, shape index: {}]
  %s1 = inlined_call_operand.vmem [shape: f32[2], index: 1, kind: input, shape index: {}]
  %s2 = inlined_call_operand.hbm [shape: f32[2], index: 2, kind: input, shape index: {}]
  %s3 = inlined_call_operand.hbm [shape: f32[3], index: 3, kind: input, shape index: {}]
  %s4 = inlined_call_operand.vmem [shape: f32[2,128], index: 4, kind: input, shape index: {}]
  %s5 = inlined_call_operand.vmem [shape: f32[2,128], index: 5, kind: input, shape index: {}]
  %s6 = inlined_call_operand.hbm [shape: f32[2,128], index: 6, kind: output, shape index: {}]
  %s7 = sld [smem:[#allocation0]]
  $region50: #{tpu_custom_call.1} parent=0
    _
  %s9 = ssub.s32 1, %s7
  %s10 = scalar_select 0, %s9, %s7
  $region1: #{tpu_custom_call.1} parent=0
    #allocation2 [shape = 'u8[512]{0}', space=smem, size = 0x200, scoped, tag = 'input window, operand 0, single buffered']
    #allocation3 [shape = 's32[1]{0}', space=sflag, size = 0x4, scoped, tag = 'scoped memory for tpu_custom_call.1']
    #allocation4 [shape = 's32[1]{0}', space=sflag, size = 0x4, scoped, tag = 'scoped memory for tpu_custom_call.1']
    #allocation5 [shape = 's32[1]{0}', space=sflag, size = 0x4, scoped, tag = 'scoped memory for tpu_custom_call.1']
    #allocation6 [shape = 'u8[512]{0}', space=smem, size = 0x200, scoped, tag = 'input window, operand 1, single buffered']
    #allocation7 [shape = 'u8[512]{0}', space=smem, size = 0x200, scoped, tag = 'input window, operand 2, single buffered']
    #allocation8 [shape = 's32[1]{0}', space=sflag, size = 0x4, scoped, tag = 'scoped memory for tpu_custom_call.1']
    #allocation9 [shape = 'u8[512]{0}', space=smem, size = 0x200, scoped, tag = 'input window, operand 3, single buffered']
    #allocation10 [shape = 'u8[1024]{0}', space=vmem, size = 0x400, scoped, tag = 'output window, operand 0, single buffered']
    %11 = vsyncpa [#allocation4], 0
    %12 = vsyncpa [#allocation5], 0
    %13 = vsyncpa [#allocation8], 0
    %14 = vsyncpa [#allocation3], 0
    // Predicated region
    $region2: #{tpu_custom_call.1} parent=1 // pred_check
      _
    $region3: #{tpu_custom_call.1} parent=1 // pred_check_branch
      %16 = sbr.rel (0) target = $region5
    $region4: #{tpu_custom_call.1} parent=1 // pred_region
      %s18 = ssub.s32 16, 16
      %19 = vsyncadd [#allocation4], %s18
      %22 = dma.hbm_to_smem %s0, 16, [#allocation2], [#allocation4]
    $region5: #{tpu_custom_call.1} parent=1 // pred_fallthru
      _
    // Predicated region
    $region6: #{tpu_custom_call.1} parent=1 // pred_check
      _
    $region7: #{tpu_custom_call.1} parent=1 // pred_check_branch
      %24 = sbr.rel (0) target = $region9
    $region8: #{tpu_custom_call.1} parent=1 // pred_region
      %s26 = ssub.s32 16, 16
      %27 = vsyncadd [#allocation5], %s26
      %s29 = sshll.u32 %s1, 4
      %s30 = int_to_ptr.vmem [resolvable:$true] %s29
      %32 = dma.vmem_to_smem %s30, 16, [#allocation6], [#allocation5]
    $region9: #{tpu_custom_call.1} parent=1 // pred_fallthru
      _
    // Predicated region
    $region10: #{tpu_custom_call.1} parent=1 // pred_check
      _
    $region11: #{tpu_custom_call.1} parent=1 // pred_check_branch
      %34 = sbr.rel (0) target = $region13
    $region12: #{tpu_custom_call.1} parent=1 // pred_region
      %s36 = ssub.s32 16, 16
      %37 = vsyncadd [#allocation8], %s36
      %40 = dma.hbm_to_smem %s2, 16, [#allocation7], [#allocation8]
    $region13: #{tpu_custom_call.1} parent=1 // pred_fallthru
      _
    // Predicated region
    $region14: #{tpu_custom_call.1} parent=1 // pred_check
      _
    $region15: #{tpu_custom_call.1} parent=1 // pred_check_branch
      %42 = sbr.rel (0) target = $region17
    $region16: #{tpu_custom_call.1} parent=1 // pred_region
      %s44 = ssub.s32 16, 16
      %45 = vsyncadd [#allocation8], %s44
      %48 = dma.hbm_to_smem %s3, 16, [#allocation9], [#allocation8]
    $region17: #{tpu_custom_call.1} parent=1 // pred_fallthru
      _
    // Predicated region
    $region18: #{tpu_custom_call.1} parent=1 // pred_check
      _
    $region19: #{tpu_custom_call.1} parent=1 // pred_check_branch
      %50 = sbr.rel (0) target = $region21
    $region20: #{tpu_custom_call.1} parent=1 // pred_region
      _
    $region21: #{tpu_custom_call.1} parent=1 // pred_fallthru
      _
    // Predicated region
    $region22: #{tpu_custom_call.1} parent=1 // pred_check
      _
    $region23: #{tpu_custom_call.1} parent=1 // pred_check_branch
      %52 = sbr.rel (0) target = $region25
    $region24: #{tpu_custom_call.1} parent=1 // pred_region
      _
    $region25: #{tpu_custom_call.1} parent=1 // pred_fallthru
      _
    // Predicated region
    $region26: #{tpu_custom_call.1} parent=1 // pred_check
      _
    $region27: #{tpu_custom_call.1} parent=1 // pred_check_branch
      %54 = sbr.rel (0) target = $region29
    $region28: #{tpu_custom_call.1} parent=1 // pred_region
      %55 = dma.done [#allocation4], 16
    $region29: #{tpu_custom_call.1} parent=1 // pred_fallthru
      _
    // Predicated region
    $region30: #{tpu_custom_call.1} parent=1 // pred_check
      _
    $region31: #{tpu_custom_call.1} parent=1 // pred_check_branch
      %57 = sbr.rel (0) target = $region33
    $region32: #{tpu_custom_call.1} parent=1 // pred_region
      %58 = dma.done [#allocation5], 16
    $region33: #{tpu_custom_call.1} parent=1 // pred_fallthru
      _
    // Predicated region
    $region34: #{tpu_custom_call.1} parent=1 // pred_check
      _
    $region35: #{tpu_custom_call.1} parent=1 // pred_check_branch
      %60 = sbr.rel (0) target = $region37
    $region36: #{tpu_custom_call.1} parent=1 // pred_region
      %61 = dma.done [#allocation8], 16
    $region37: #{tpu_custom_call.1} parent=1 // pred_fallthru
      _
    // Predicated region
    $region38: #{tpu_custom_call.1} parent=1 // pred_check
      _
    $region39: #{tpu_custom_call.1} parent=1 // pred_check_branch
      %63 = sbr.rel (0) target = $region41
    $region40: #{tpu_custom_call.1} parent=1 // pred_region
      %64 = dma.done [#allocation8], 16
    $region41: #{tpu_custom_call.1} parent=1 // pred_fallthru
      _
    %65 = sfence
    %v66 = vld [vmem:[%s4] sm:$0x3]
    %v67 = vld [vmem:[%s5] sm:$0x3]
    %v68 = vsub.f32 %v66, %v67
    %v69 = vadd.f32 %v66, 1.0
    %v70 = vadd.f32 %v69, 22.45713
    %v71 = vmul.f32 %v70, %v69
    %v72 = vadd.f32 %v71, 189.28651
    %v73 = vmul.f32 %v72, %v69
    %v74 = vadd.f32 %v73, 709.72955
    %v75 = vmul.f32 %v74, %v69
    %v76 = vadd.f32 %v75, 998.9807
    %v77 = vadd.f32 %v69, 10.0
    %v78 = vmul.f32 %v77, %v69
    %v79 = vadd.f32 %v78, 35.0
    %v80 = vmul.f32 %v79, %v69
    %v81 = vadd.f32 %v80, 50.0
    %v82 = vmul.f32 %v81, %v69
    %v83 = vadd.f32 %v82, 24.0
    %v84 = vmul.f32 %v83, %v69
    %v85 = vrcp.pop %v84
    %v86 = vmul.f32 %v76, %v85
    %v87 = vadd.f32 %v69, 5.5
    %v88 = vadd.f32 %v69, 0.5
    %v89 = vlog2.pop %v87
    %v90 = vmul.f32 %v89, 0.6931472
    %v91 = vmul.f32 %v88, %v90
    %v92 = vsub.f32 %v91, %v87
    %v93 = vlog2.pop %v86
    %v94 = vmul.f32 %v93, 0.6931472
    %v95 = vadd.f32 %v92, %v94
    %v96 = vadd.f32 %v67, 1.0
    %v97 = vadd.f32 %v96, 22.45713
    %v98 = vmul.f32 %v97, %v96
    %v99 = vadd.f32 %v98, 189.28651
    %v100 = vmul.f32 %v99, %v96
    %v101 = vadd.f32 %v100, 709.72955
    %v102 = vmul.f32 %v101, %v96
    %v103 = vadd.f32 %v102, 998.9807
    %v104 = vadd.f32 %v96, 10.0
    %v105 = vmul.f32 %v104, %v96
    %v106 = vadd.f32 %v105, 35.0
    %v107 = vmul.f32 %v106, %v96
    %v108 = vadd.f32 %v107, 50.0
    %v109 = vmul.f32 %v108, %v96
    %v110 = vadd.f32 %v109, 24.0
    %v111 = vmul.f32 %v110, %v96
    %v112 = vrcp.pop %v111
    %v113 = vmul.f32 %v103, %v112
    %v114 = vadd.f32 %v96, 5.5
    %v115 = vadd.f32 %v96, 0.5
    %v116 = vlog2.pop %v114
    %v117 = vmul.f32 %v116, 0.6931472
    %v118 = vmul.f32 %v115, %v117
    %v119 = vsub.f32 %v118, %v114
    %v120 = vlog2.pop %v113
    %v121 = vmul.f32 %v120, 0.6931472
    %v122 = vadd.f32 %v119, %v121
    %v123 = vsub.f32 %v95, %v122
    %v124 = vadd.f32 %v68, 1.0
    %v125 = vadd.f32 %v124, 22.45713
    %v126 = vmul.f32 %v125, %v124
    %v127 = vadd.f32 %v126, 189.28651
    %v128 = vmul.f32 %v127, %v124
    %v129 = vadd.f32 %v128, 709.72955
    %v130 = vmul.f32 %v129, %v124
    %v131 = vadd.f32 %v130, 998.9807
    %v132 = vadd.f32 %v124, 10.0
    %v133 = vmul.f32 %v132, %v124
    %v134 = vadd.f32 %v133, 35.0
    %v135 = vmul.f32 %v134, %v124
    %v136 = vadd.f32 %v135, 50.0
    %v137 = vmul.f32 %v136, %v124
    %v138 = vadd.f32 %v137, 24.0
    %v139 = vmul.f32 %v138, %v124
    %v140 = vrcp.pop %v139
    %v141 = vmul.f32 %v131, %v140
    %v142 = vadd.f32 %v124, 5.5
    %v143 = vadd.f32 %v124, 0.5
    %v144 = vlog2.pop %v142
    %v145 = vmul.f32 %v144, 0.6931472
    %v146 = vmul.f32 %v143, %v145
    %v147 = vsub.f32 %v146, %v142
    %v148 = vlog2.pop %v141
    %v149 = vmul.f32 %v148, 0.6931472
    %v150 = vadd.f32 %v147, %v149
    %v151 = vsub.f32 %v123, %v150
    %s152 = sld [smem:[#allocation9]]
    %s153 = sld [smem:[#allocation9 + $0x1]]
    %s154 = sld [smem:[#allocation9 + $0x2]]
    %s155 = sld [smem:[#allocation7]]
    %s156 = sld [smem:[#allocation2]]
    %v157 = vstv %s156
    %v158 = vmul.f32 %v67, %v157
    %v159 = vstv %s155
    %v160 = vadd.f32 %v159, %v158
    %s161 = sld [smem:[#allocation6]]
    %v162 = vstv %s161
    %v163 = vmul.f32 %v68, %v162
    %v164 = vadd.f32 %v160, %v163
    %s165 = sld [smem:[#allocation7 + $0x1]]
    %s166 = sld [smem:[#allocation2 + $0x1]]
    %v167 = vstv %s166
    %v168 = vmul.f32 %v67, %v167
    %v169 = vstv %s165
    %v170 = vadd.f32 %v169, %v168
    %s171 = sld [smem:[#allocation6 + $0x1]]
    %v172 = vstv %s171
    %v173 = vmul.f32 %v68, %v172
    %v174 = vadd.f32 %v170, %v173
    %v175 = vstv %s152
    %v176 = vadd.f32 %v67, %v175
    %v177 = vadd.f32 %v176, 22.45713
    %v178 = vmul.f32 %v177, %v176
    %v179 = vadd.f32 %v178, 189.28651
    %v180 = vmul.f32 %v179, %v176
    %v181 = vadd.f32 %v180, 709.72955
    %v182 = vmul.f32 %v181, %v176
    %v183 = vadd.f32 %v182, 998.9807
    %v184 = vadd.f32 %v176, 10.0
    %v185 = vmul.f32 %v184, %v176
    %v186 = vadd.f32 %v185, 35.0
    %v187 = vmul.f32 %v186, %v176
    %v188 = vadd.f32 %v187, 50.0
    %v189 = vmul.f32 %v188, %v176
    %v190 = vadd.f32 %v189, 24.0
    %v191 = vmul.f32 %v190, %v176
    %v192 = vrcp.pop %v191
    %v193 = vmul.f32 %v183, %v192
    %v194 = vadd.f32 %v176, 5.5
    %v195 = vadd.f32 %v176, 0.5
    %v196 = vlog2.pop %v194
    %v197 = vmul.f32 %v196, 0.6931472
    %v198 = vmul.f32 %v195, %v197
    %v199 = vsub.f32 %v198, %v194
    %v200 = vlog2.pop %v193
    %v201 = vmul.f32 %v200, 0.6931472
    %v202 = vadd.f32 %v199, %v201
    %v203 = vstv %s154
    %v204 = vadd.f32 %v203, %v202
    %v205 = vstv %s153
    %v206 = vadd.f32 %v68, %v205
    %v207 = vadd.f32 %v206, 22.45713
    %v208 = vmul.f32 %v207, %v206
    %v209 = vadd.f32 %v208, 189.28651
    %v210 = vmul.f32 %v209, %v206
    %v211 = vadd.f32 %v210, 709.72955
    %v212 = vmul.f32 %v211, %v206
    %v213 = vadd.f32 %v212, 998.9807
    %v214 = vadd.f32 %v206, 10.0
    %v215 = vmul.f32 %v214, %v206
    %v216 = vadd.f32 %v215, 35.0
    %v217 = vmul.f32 %v216, %v206
    %v218 = vadd.f32 %v217, 50.0
    %v219 = vmul.f32 %v218, %v206
    %v220 = vadd.f32 %v219, 24.0
    %v221 = vmul.f32 %v220, %v206
    %v222 = vrcp.pop %v221
    %v223 = vmul.f32 %v213, %v222
    %v224 = vadd.f32 %v206, 5.5
    %v225 = vadd.f32 %v206, 0.5
    %v226 = vlog2.pop %v224
    %v227 = vmul.f32 %v226, 0.6931472
    %v228 = vmul.f32 %v225, %v227
    %v229 = vsub.f32 %v228, %v224
    %v230 = vlog2.pop %v223
    %v231 = vmul.f32 %v230, 0.6931472
    %v232 = vadd.f32 %v229, %v231
    %v233 = vadd.f32 %v204, %v232
    %v234 = vadd.f32 %v66, %v175
    %v235 = vadd.f32 %v234, %v205
    %v236 = vadd.f32 %v235, 22.45713
    %v237 = vmul.f32 %v236, %v235
    %v238 = vadd.f32 %v237, 189.28651
    %v239 = vmul.f32 %v238, %v235
    %v240 = vadd.f32 %v239, 709.72955
    %v241 = vmul.f32 %v240, %v235
    %v242 = vadd.f32 %v241, 998.9807
    %v243 = vadd.f32 %v235, 10.0
    %v244 = vmul.f32 %v243, %v235
    %v245 = vadd.f32 %v244, 35.0
    %v246 = vmul.f32 %v245, %v235
    %v247 = vadd.f32 %v246, 50.0
    %v248 = vmul.f32 %v247, %v235
    %v249 = vadd.f32 %v248, 24.0
    %v250 = vmul.f32 %v249, %v235
    %v251 = vrcp.pop %v250
    %v252 = vmul.f32 %v242, %v251
    %v253 = vadd.f32 %v235, 5.5
    %v254 = vadd.f32 %v235, 0.5
    %v255 = vlog2.pop %v253
    %v256 = vmul.f32 %v255, 0.6931472
    %v257 = vmul.f32 %v254, %v256
    %v258 = vsub.f32 %v257, %v253
    %v259 = vlog2.pop %v252
    %v260 = vmul.f32 %v259, 0.6931472
    %v261 = vadd.f32 %v258, %v260
    %v262 = vsub.f32 %v233, %v261
    %v263 = vmax.f32 %v164, %v174
    %v264 = vmax.f32 %v263, %v262
    %v265 = vsub.f32 %v164, %v264
    %v266 = vmul.f32 %v265, 1.442695
    %v267 = vpow.pop %v266
    %v268 = vsub.f32 %v174, %v264
    %v269 = vmul.f32 %v268, 1.442695
    %v270 = vpow.pop %v269
    %v271 = vadd.f32 %v267, %v270
    %v272 = vsub.f32 %v262, %v264
    %v273 = vmul.f32 %v272, 1.442695
    %v274 = vpow.pop %v273
    %v275 = vadd.f32 %v271, %v274
    %v276 = vadd.f32 %v151, %v264
    %v277 = vlog2.pop %v275
    %v278 = vmul.f32 %v277, 0.6931472
    %v279 = vadd.f32 %v276, %v278
    %280 = vst [vmem:[#allocation10] sm:$0x3] %v279
    // Predicated region
    $region42: #{tpu_custom_call.1} parent=1 // pred_check
      _
    $region43: #{tpu_custom_call.1} parent=1 // pred_check_branch
      %282 = sbr.rel (0) target = $region45
    $region44: #{tpu_custom_call.1} parent=1 // pred_region
      %s284 = ssub.s32 32, 32
      %285 = vsyncadd [#allocation3], %s284
      %s287 = sshll.u32 [#allocation10], 4
      %s288 = int_to_ptr.vmem [resolvable:$true] %s287
      %290 = dma.vmem_to_hbm [thread:$0]  %s288, 32, %s6, [#allocation3]
    $region45: #{tpu_custom_call.1} parent=1 // pred_fallthru
      _
    // Predicated region
    $region46: #{tpu_custom_call.1} parent=1 // pred_check
      _
    $region47: #{tpu_custom_call.1} parent=1 // pred_check_branch
      %292 = sbr.rel (0) target = $region49
    $region48: #{tpu_custom_call.1} parent=1 // pred_region
      %293 = dma.done [#allocation3], 32
    $region49: #{tpu_custom_call.1} parent=1 // pred_fallthru
      _
    %294 = vsyncpa [#allocation3], 1
    %295 = vsyncpa [#allocation4], 1
    %296 = vsyncpa [#allocation8], 1
    %297 = vsyncpa [#allocation5], 1

</llo_original>
